<compile_context>
chip_gen: v5e
topology: v5e:2x2
jax: 0.10.0
libtpu: 0.0.40
codegen_flags: <defaults>
</compile_context>

<pallas_src>
import functools
import math

import jax
import jax.numpy as jnp
from jax.experimental import pallas as pl
from jax.experimental.pallas import tpu as pltpu


def _make_divisible(v, divisor, min_value=None):
    if min_value is None:
        min_value = divisor
    new_v = max(min_value, int(v + divisor / 2) // divisor * divisor)
    if new_v < 0.9 * v:
        new_v += divisor
    return new_v


# ---------------------------------------------------------------------------
# Phase 1: pooled-sum reduction + batched FC gate (tiny output (B, C) in f32).
# ---------------------------------------------------------------------------
def _se_gate_kernel(x_ref, w1_ref, b1_ref, w2_ref, b2_ref, gate_ref, acc_ref,
                    *, inv_hw):
    t = pl.program_id(0)

    @pl.when(t == 0)
    def _():
        acc_ref[...] = jnp.zeros_like(acc_ref)

    # Partial spatial sum with f32 accumulation (no full f32 copy of the tile).
    acc_ref[...] += jnp.sum(x_ref[...], axis=2, dtype=jnp.float32)

    @pl.when(t == pl.num_programs(0) - 1)
    def _():
        pooled = acc_ref[...] * inv_hw                                # (B, C) f32
        h = jnp.dot(pooled, w1_ref[...],
                    preferred_element_type=jnp.float32) + b1_ref[...]
        h = h * jax.nn.sigmoid(h)                                     # SiLU
        y = jnp.dot(h, w2_ref[...],
                    preferred_element_type=jnp.float32) + b2_ref[...]
        gate_ref[...] = jax.nn.sigmoid(y)                             # (B, C) f32


# ---------------------------------------------------------------------------
# Phase 2: pure tiled broadcast multiply (mem-bound; runs in x's dtype).
# ---------------------------------------------------------------------------
def _se_scale_kernel(x_ref, g_ref, o_ref):
    # x_ref: (Bt, C, HW_tile)  g_ref: (Bt, C, 1) f32 -> cast once, lane-broadcast.
    o_ref[...] = x_ref[...] * g_ref[...].astype(o_ref.dtype)


# ---------------------------------------------------------------------------
# Tile-size helpers.
# ---------------------------------------------------------------------------
def _pick_hw_tile(hw, rows, itemsize, max_tile_bytes):
    """Largest multiple-of-128 divisor of hw with rows*tile*itemsize <= budget."""
    if hw % 128 != 0:
        # Fall back to the full extent (allowed by BlockSpec rules).  For odd
        # spatial sizes (e.g. 7x7) padding HW to a multiple of 128 in the
        # wrapper would avoid masked partial stores; not needed here.
        return hw
    max_elems = max(128, max_tile_bytes // max(1, rows * itemsize))
    for cand in range(hw, 0, -128):
        if hw % cand == 0 and cand <= max_elems:
            return cand
    return 128


def _pick_bt(b, per_batch_tile_bytes, hw_tiles, target_bytes=512 * 1024):
    """Batch several elements per grid step when tiles are small, but keep
    at least 2 grid steps so both TensorCores (v7x) get work."""
    best = 1
    for cand in range(1, b + 1):
        if b % cand:
            continue
        if cand * per_batch_tile_bytes > target_bytes:
            break
        if (b // cand) * hw_tiles < 2:
            continue
        best = cand
    return best


# ---------------------------------------------------------------------------
# Public wrapper (NCHW, matching PyTorch).
# ---------------------------------------------------------------------------
def se_layer(x, w1_t, b1, w2_t, b2):
    """x: (B, C, H, W).  w1_t: (C, hidden), b1: (hidden,), w2_t: (hidden, C), b2: (C,)."""
    B, C, H, W = x.shape
    HW = H * W
    hidden = w1_t.shape[1]
    itemsize = jnp.dtype(x.dtype).itemsize

    x_flat = x.reshape(B, C, HW)
    b1_2d = b1.reshape(1, hidden).astype(jnp.float32)
    b2_2d = b2.reshape(1, C).astype(jnp.float32)

    # -------- phase 1: gate (B, C) in f32 --------
    hw_tile_g = _pick_hw_tile(HW, B * C, itemsize, max_tile_bytes=4 << 20)
    n_hw_g = HW // hw_tile_g

    gate = pl.pallas_call(
        functools.partial(_se_gate_kernel, inv_hw=1.0 / float(HW)),
        out_shape=jax.ShapeDtypeStruct((B, C), jnp.float32),
        grid=(n_hw_g,),
        in_specs=[
            pl.BlockSpec((B, C, hw_tile_g), lambda t: (0, 0, t)),
            pl.BlockSpec((C, hidden), lambda t: (0, 0)),
            pl.BlockSpec((1, hidden), lambda t: (0, 0)),
            pl.BlockSpec((hidden, C), lambda t: (0, 0)),
            pl.BlockSpec((1, C), lambda t: (0, 0)),
        ],
        out_specs=pl.BlockSpec((B, C), lambda t: (0, 0)),
        scratch_shapes=[pltpu.VMEM((B, C), jnp.float32)],
        compiler_params=pltpu.CompilerParams(
            dimension_semantics=("arbitrary",)),
        cost_estimate=pl.CostEstimate(
            flops=B * C * HW + 4 * B * C * hidden,
            transcendentals=2 * B * (hidden + C),
            bytes_accessed=B * C * HW * itemsize + B * C * 4
            + (2 * C * hidden + hidden + C) * 4),
    )(x_flat, w1_t.astype(jnp.float32), b1_2d, w2_t.astype(jnp.float32), b2_2d)

    # -------- phase 2: tiled broadcast multiply --------
    hw_tile = _pick_hw_tile(HW, C, itemsize, max_tile_bytes=2 << 20)
    n_hw = HW // hw_tile
    bt = _pick_bt(B, C * hw_tile * itemsize, n_hw)
    gate3d = gate.reshape(B, C, 1)   # C on the sublane axis -> cheap lane broadcast

    out_flat = pl.pallas_call(
        _se_scale_kernel,
        out_shape=jax.ShapeDtypeStruct((B, C, HW), x.dtype),
        grid=(B // bt, n_hw),
        in_specs=[
            pl.BlockSpec((bt, C, hw_tile), lambda b, t: (b, 0, t)),
            pl.BlockSpec((bt, C, 1), lambda b, t: (b, 0, 0)),
        ],
        out_specs=pl.BlockSpec((bt, C, hw_tile), lambda b, t: (b, 0, t)),
        compiler_params=pltpu.CompilerParams(
            dimension_semantics=("parallel", "parallel")),
        cost_estimate=pl.CostEstimate(
            flops=B * C * HW,
            transcendentals=0,
            bytes_accessed=2 * B * C * HW * itemsize + B * C * 4),
    )(x_flat, gate3d)

    return out_flat.reshape(B, C, H, W)


# ---------------------------------------------------------------------------
# Reference + self-test.
# ---------------------------------------------------------------------------
def _reference(x, w1_t, b1, w2_t, b2):
    pooled = jnp.mean(x.astype(jnp.float32), axis=(2, 3))          # (B, C)
    h = pooled @ w1_t + b1
    h = h * jax.nn.sigmoid(h)
    y = jax.nn.sigmoid(h @ w2_t + b2)                               # (B, C)
    return (x * y[:, :, None, None].astype(x.dtype)).astype(x.dtype)


if __name__ == "__main__":
    # SELayer(inp=16, oup=16, reduction=4) -> hidden = _make_divisible(4, 8) = 8
    B, C, H, W = 2, 16, 16, 16
    inp = oup = C
    reduction = 4
    hidden = _make_divisible(inp // reduction, 8)

    key = jax.random.PRNGKey(0)
    kx, k1, kb1, k2, kb2 = jax.random.split(key, 5)

    x = jax.random.normal(kx, (B, C, H, W), dtype=jnp.float32)

    # PyTorch Linear stores W as (out, in); we keep the transposed (in, out)
    # layout so the kernel does a plain x @ W.
    bound1 = 1.0 / math.sqrt(oup)
    w1_t = jax.random.uniform(k1, (oup, hidden), minval=-bound1, maxval=bound1,
                              dtype=jnp.float32)
    b1 = jax.random.uniform(kb1, (hidden,), minval=-bound1, maxval=bound1,
                            dtype=jnp.float32)
    bound2 = 1.0 / math.sqrt(hidden)
    w2_t = jax.random.uniform(k2, (hidden, oup), minval=-bound2, maxval=bound2,
                              dtype=jnp.float32)
    b2 = jax.random.uniform(kb2, (oup,), minval=-bound2, maxval=bound2,
                            dtype=jnp.float32)

    out = se_layer(x, w1_t, b1, w2_t, b2)
    out = jax.block_until_ready(out)

    ref = _reference(x, w1_t, b1, w2_t, b2)
    assert out.shape == (B, C, H, W)
    assert jnp.allclose(out, ref, atol=1e-5, rtol=1e-5)

    print("KERNEL_OK")
</pallas_src>

<mosaic_0001>
module attributes {stable_mosaic.version = 11 : i64} {
  func.func @_se_gate_kernel(%arg0: i32, %arg1: memref<2x16x256xf32, #tpu.memory_space<vmem>>, %arg2: memref<16x8xf32, #tpu.memory_space<vmem>>, %arg3: memref<1x8xf32, #tpu.memory_space<vmem>>, %arg4: memref<8x16xf32, #tpu.memory_space<vmem>>, %arg5: memref<1x16xf32, #tpu.memory_space<vmem>>, %arg6: memref<2x16xf32, #tpu.memory_space<vmem>>, %arg7: memref<2x16xf32, #tpu.memory_space<vmem>>) attributes {dimension_semantics = [#tpu.dimension_semantics<arbitrary>], iteration_bounds = array<i64: 1>, scalar_prefetch = 0 : i64, scratch_operands = 1 : i64, tpu.core_type = #tpu.core_type<tc>, window_params = [{transform_indices = @transform_0, window_bounds = array<i64: 2, 16, 256>}, {pipeline_mode = #tpu.pipeline_mode<synchronous>, transform_indices = @transform_1, window_bounds = array<i64: 16, 8>}, {pipeline_mode = #tpu.pipeline_mode<synchronous>, transform_indices = @transform_2, window_bounds = array<i64: 1, 8>}, {pipeline_mode = #tpu.pipeline_mode<synchronous>, transform_indices = @transform_3, window_bounds = array<i64: 8, 16>}, {pipeline_mode = #tpu.pipeline_mode<synchronous>, transform_indices = @transform_4, window_bounds = array<i64: 1, 16>}, {pipeline_mode = #tpu.pipeline_mode<synchronous>, transform_indices = @transform_5, window_bounds = array<i64: 2, 16>}]} {
    %c0_i32 = arith.constant 0 : i32
    %0 = arith.cmpi eq, %arg0, %c0_i32 : i32
    %1 = arith.extui %0 : i1 to i32
    %c0_i32_0 = arith.constant 0 : i32
    %2 = arith.cmpi ne, %1, %c0_i32_0 : i32
    scf.if %2 {
      %cst_9 = arith.constant 0.000000e+00 : f32
      %11 = vector.broadcast %cst_9 : f32 to vector<2x16xf32>
      %c0_10 = arith.constant 0 : index
      %c0_11 = arith.constant 0 : index
      %12 = vector.load %arg7[%c0_10, %c0_11] : memref<2x16xf32, #tpu.memory_space<vmem>>, vector<2x16xf32>
      tpu.vector_store %arg7[%c0_10, %c0_11], %11 {strides = array<i32>} : memref<2x16xf32, #tpu.memory_space<vmem>>, vector<2x16xf32>,
    } else {
    }
    %c0 = arith.constant 0 : index
    %c0_1 = arith.constant 0 : index
    %3 = vector.load %arg7[%c0, %c0_1] : memref<2x16xf32, #tpu.memory_space<vmem>>, vector<2x16xf32>
    %c0_2 = arith.constant 0 : index
    %c0_3 = arith.constant 0 : index
    %c0_4 = arith.constant 0 : index
    %4 = vector.load %arg1[%c0_2, %c0_3, %c0_4] : memref<2x16x256xf32, #tpu.memory_space<vmem>>, vector<2x16x256xf32>
    %cst = arith.constant dense<0.000000e+00> : vector<2x16xf32>
    %5 = vector.multi_reduction <add>, %4, %cst [2] : vector<2x16x256xf32> to vector<2x16xf32>
    %6 = arith.addf %3, %5 : vector<2x16xf32>
    %c0_5 = arith.constant 0 : index
    %c0_6 = arith.constant 0 : index
    %7 = vector.load %arg7[%c0_5, %c0_6] : memref<2x16xf32, #tpu.memory_space<vmem>>, vector<2x16xf32>
    tpu.vector_store %arg7[%c0_5, %c0_6], %6 {strides = array<i32>} : memref<2x16xf32, #tpu.memory_space<vmem>>, vector<2x16xf32>,
    %c0_i32_7 = arith.constant 0 : i32
    %8 = arith.cmpi eq, %arg0, %c0_i32_7 : i32
    %9 = arith.extui %8 : i1 to i32
    %c0_i32_8 = arith.constant 0 : i32
    %10 = arith.cmpi ne, %9, %c0_i32_8 : i32
    scf.if %10 {
      %c0_9 = arith.constant 0 : index
      %c0_10 = arith.constant 0 : index
      %11 = vector.load %arg7[%c0_9, %c0_10] : memref<2x16xf32, #tpu.memory_space<vmem>>, vector<2x16xf32>
      %cst_11 = arith.constant 3.906250e-03 : f32
      %12 = vector.broadcast %cst_11 : f32 to vector<2x16xf32>
      %13 = arith.mulf %11, %12 : vector<2x16xf32>
      %c0_12 = arith.constant 0 : index
      %c0_13 = arith.constant 0 : index
      %14 = vector.load %arg2[%c0_12, %c0_13] : memref<16x8xf32, #tpu.memory_space<vmem>>, vector<16x8xf32>
      %cst_14 = arith.constant dense<0.000000e+00> : vector<2x8xf32>
      %15 = tpu.matmul %13, %14, %cst_14 {dimension_numbers = #tpu.dot_dimension_numbers<[1], [0], [0], [1], [0, 0, 1, 1], [], []>} : vector<2x16xf32>, vector<16x8xf32>, vector<2x8xf32> -> vector<2x8xf32>
      %c0_15 = arith.constant 0 : index
      %c0_16 = arith.constant 0 : index
      %16 = vector.load %arg3[%c0_15, %c0_16] : memref<1x8xf32, #tpu.memory_space<vmem>>, vector<1x8xf32>
      %17 = vector.broadcast %16 : vector<1x8xf32> to vector<2x8xf32>
      %18 = arith.addf %15, %17 : vector<2x8xf32>
      %19 = arith.negf %18 : vector<2x8xf32>
      %20 = math.exp %19 : vector<2x8xf32>
      %cst_17 = arith.constant 1.000000e+00 : f32
      %21 = vector.broadcast %cst_17 : f32 to vector<2x8xf32>
      %22 = arith.addf %21, %20 : vector<2x8xf32>
      %23 = arith.divf %21, %22 : vector<2x8xf32>
      %24 = arith.mulf %18, %23 : vector<2x8xf32>
      %c0_18 = arith.constant 0 : index
      %c0_19 = arith.constant 0 : index
      %25 = vector.load %arg4[%c0_18, %c0_19] : memref<8x16xf32, #tpu.memory_space<vmem>>, vector<8x16xf32>
      %cst_20 = arith.constant dense<0.000000e+00> : vector<2x16xf32>
      %26 = tpu.matmul %24, %25, %cst_20 {dimension_numbers = #tpu.dot_dimension_numbers<[1], [0], [0], [1], [0, 0, 1, 1], [], []>} : vector<2x8xf32>, vector<8x16xf32>, vector<2x16xf32> -> vector<2x16xf32>
      %c0_21 = arith.constant 0 : index
      %c0_22 = arith.constant 0 : index
      %27 = vector.load %arg5[%c0_21, %c0_22] : memref<1x16xf32, #tpu.memory_space<vmem>>, vector<1x16xf32>
      %28 = vector.broadcast %27 : vector<1x16xf32> to vector<2x16xf32>
      %29 = arith.addf %26, %28 : vector<2x16xf32>
      %30 = arith.negf %29 : vector<2x16xf32>
      %31 = math.exp %30 : vector<2x16xf32>
      %cst_23 = arith.constant 1.000000e+00 : f32
      %32 = vector.broadcast %cst_23 : f32 to vector<2x16xf32>
      %33 = arith.addf %32, %31 : vector<2x16xf32>
      %34 = arith.divf %32, %33 : vector<2x16xf32>
      %c0_24 = arith.constant 0 : index
      %c0_25 = arith.constant 0 : index
      %35 = vector.load %arg6[%c0_24, %c0_25] : memref<2x16xf32, #tpu.memory_space<vmem>>, vector<2x16xf32>
      tpu.vector_store %arg6[%c0_24, %c0_25], %34 {strides = array<i32>} : memref<2x16xf32, #tpu.memory_space<vmem>>, vector<2x16xf32>,
    } else {
    }
    return
  }
  func.func @transform_0(%arg0: i32) -> (i32, i32, i32) {
    %c0_i32 = arith.constant 0 : i32
    %c0_i32_0 = arith.constant 0 : i32
    %c0_i32_1 = arith.constant 0 : i32
    return %c0_i32, %c0_i32_0, %arg0 : i32, i32, i32
  }
  func.func @transform_1(%arg0: i32) -> (i32, i32) {
    %c0_i32 = arith.constant 0 : i32
    %c0_i32_0 = arith.constant 0 : i32
    %c0_i32_1 = arith.constant 0 : i32
    return %c0_i32, %c0_i32_0 : i32, i32
  }
  func.func @transform_2(%arg0: i32) -> (i32, i32) {
    %c0_i32 = arith.constant 0 : i32
    %c0_i32_0 = arith.constant 0 : i32
    %c0_i32_1 = arith.constant 0 : i32
    return %c0_i32, %c0_i32_0 : i32, i32
  }
  func.func @transform_3(%arg0: i32) -> (i32, i32) {
    %c0_i32 = arith.constant 0 : i32
    %c0_i32_0 = arith.constant 0 : i32
    %c0_i32_1 = arith.constant 0 : i32
    return %c0_i32, %c0_i32_0 : i32, i32
  }
  func.func @transform_4(%arg0: i32) -> (i32, i32) {
    %c0_i32 = arith.constant 0 : i32
    %c0_i32_0 = arith.constant 0 : i32
    %c0_i32_1 = arith.constant 0 : i32
    return %c0_i32, %c0_i32_0 : i32, i32
  }
  func.func @transform_5(%arg0: i32) -> (i32, i32) {
    %c0_i32 = arith.constant 0 : i32
    %c0_i32_0 = arith.constant 0 : i32
    %c0_i32_1 = arith.constant 0 : i32
    return %c0_i32, %c0_i32_0 : i32, i32
  }
}

</mosaic_0001>

<llo_original>
// kernel: tpu_custom_call.1
$region0: #{tpu_custom_call.1}
  #allocation0 [shape = 'u32[]', space=smem, size = 0x4, offset = 0x4, fixed_abs, tag = 'smem constant byte address 0x4 - core index']
  #allocation1 [shape = 'u32[72,128]{1,0:T(1,128)}', space=vmem, size = 0x9000, scoped, tag = 'internal scratch']
  #allocation2 [shape = 'f32[2,16]{1,0:T(2,128)}', space=vmem, size = 0x400, scoped, tag = 'scratch operand']
  %s0 = inlined_call_operand.hbm [shape: f32[2,16,256], index: 0, kind: input, shape index: {}]
  %s1 = inlined_call_operand.vmem [shape: f32[16,8], index: 1, kind: input, shape index: {}]
  %s2 = inlined_call_operand.vmem [shape: f32[1,8], index: 2, kind: input, shape index: {}]
  %s3 = inlined_call_operand.vmem [shape: f32[8,16], index: 3, kind: input, shape index: {}]
  %s4 = inlined_call_operand.vmem [shape: f32[1,16], index: 4, kind: input, shape index: {}]
  %s5 = inlined_call_operand.hbm [shape: f32[2,16], index: 5, kind: output, shape index: {}]
  %s6 = sld [smem:[#allocation0]]
  $region42: #{tpu_custom_call.1} parent=0
    _
  %s8 = ssub.s32 1, %s6
  %s9 = scalar_select 0, %s8, %s6
  $region1: #{tpu_custom_call.1} parent=0
    #allocation3 [shape = 'u8[32768]{0}', space=vmem, size = 0x8000, scoped, tag = 'input window, operand 0, single buffered']
    #allocation4 [shape = 's32[1]{0}', space=sflag, size = 0x4, scoped, tag = 'scoped memory for tpu_custom_call.1']
    #allocation5 [shape = 's32[1]{0}', space=sflag, size = 0x4, scoped, tag = 'scoped memory for tpu_custom_call.1']
    #allocation6 [shape = 'u8[1024]{0}', space=vmem, size = 0x400, scoped, tag = 'output window, operand 0, single buffered']
    %10 = vsyncpa [#allocation4], 0
    %11 = vsyncpa [#allocation5], 0
    // Predicated region
    $region2: #{tpu_custom_call.1} parent=1 // pred_check
      _
    $region3: #{tpu_custom_call.1} parent=1 // pred_check_branch
      %13 = sbr.rel (0) target = $region5
    $region4: #{tpu_custom_call.1} parent=1 // pred_region
      %15 = vsyncadd [#allocation4], 0
      %s16 = sshll.u32 %s0, 4
      %s17 = int_to_ptr.hbm [resolvable:$true] %s16
      %s18 = sshll.u32 [#allocation3], 4
      %s19 = int_to_ptr.vmem [resolvable:$true] %s18
      %24 = dma.hbm_to_vmem [thread:$0]  %s17, 1024, %s19, [#allocation4], 256, 256, 16
    $region5: #{tpu_custom_call.1} parent=1 // pred_fallthru
      _
    // Predicated region
    $region6: #{tpu_custom_call.1} parent=1 // pred_check
      _
    $region7: #{tpu_custom_call.1} parent=1 // pred_check_branch
      %26 = sbr.rel (0) target = $region9
    $region8: #{tpu_custom_call.1} parent=1 // pred_region
      _
    $region9: #{tpu_custom_call.1} parent=1 // pred_fallthru
      _
    // Predicated region
    $region10: #{tpu_custom_call.1} parent=1 // pred_check
      _
    $region11: #{tpu_custom_call.1} parent=1 // pred_check_branch
      %28 = sbr.rel (0) target = $region13
    $region12: #{tpu_custom_call.1} parent=1 // pred_region
      _
    $region13: #{tpu_custom_call.1} parent=1 // pred_fallthru
      _
    // Predicated region
    $region14: #{tpu_custom_call.1} parent=1 // pred_check
      _
    $region15: #{tpu_custom_call.1} parent=1 // pred_check_branch
      %30 = sbr.rel (0) target = $region17
    $region16: #{tpu_custom_call.1} parent=1 // pred_region
      _
    $region17: #{tpu_custom_call.1} parent=1 // pred_fallthru
      _
    // Predicated region
    $region18: #{tpu_custom_call.1} parent=1 // pred_check
      _
    $region19: #{tpu_custom_call.1} parent=1 // pred_check_branch
      %32 = sbr.rel (0) target = $region21
    $region20: #{tpu_custom_call.1} parent=1 // pred_region
      _
    $region21: #{tpu_custom_call.1} parent=1 // pred_fallthru
      _
    // Predicated region
    $region22: #{tpu_custom_call.1} parent=1 // pred_check
      _
    $region23: #{tpu_custom_call.1} parent=1 // pred_check_branch
      %34 = sbr.rel (0) target = $region25
    $region24: #{tpu_custom_call.1} parent=1 // pred_region
      %36 = dma.done [#allocation4], 1024
    $region25: #{tpu_custom_call.1} parent=1 // pred_fallthru
      _
    %p37 = scmp.eq.s32.totalorder 0, 0
    // Predicated region
    $region26: #{tpu_custom_call.1} parent=1 // pred_check
      %p38 = pneg %p37
    $region27: #{tpu_custom_call.1} parent=1 // pred_check_branch
      %40 = sbr.rel (%p38) target = $region29
    $region28: #{tpu_custom_call.1} parent=1 // pred_region
      %vm41 = vcmask 123904
      %42 = vst.msk [vmem:[#allocation2] sm:$0x3] %vm41, 0.0
    $region29: #{tpu_custom_call.1} parent=1 // pred_fallthru
      _
    %v43 = vld [vmem:[#allocation2] sm:$0x3]
    %v44 = vld [vmem:[#allocation3] sm:$0xff]
    %v45 = vld [vmem:[#allocation3 + $0x8] sm:$0xff]
    %v46 = vld [vmem:[#allocation3 + $0x10] sm:$0xff]
    %v47 = vld [vmem:[#allocation3 + $0x18] sm:$0xff]
    %v48 = vld [vmem:[#allocation3 + $0x20] sm:$0xff]
    %v49 = vld [vmem:[#allocation3 + $0x28] sm:$0xff]
    %v50 = vld [vmem:[#allocation3 + $0x30] sm:$0xff]
    %v51 = vld [vmem:[#allocation3 + $0x38] sm:$0xff]
    %v52 = vadd.f32 %v44, %v45
    %53 = vadd.xlane.f32.xlu0 %v52
    %v54 = vpop.xlane.xlu0 %53
    %v55 = vadd.f32 %v46, %v47
    %56 = vadd.xlane.f32.xlu0 %v55
    %v57 = vpop.xlane.xlu0 %56
    %v58 = vadd.f32 %v48, %v49
    %59 = vadd.xlane.f32.xlu0 %v58
    %v60 = vpop.xlane.xlu0 %59
    %v61 = vadd.f32 %v50, %v51
    %62 = vadd.xlane.f32.xlu0 %v61
    %v63 = vpop.xlane.xlu0 %62
    %v68 = vlaneseq
    %v69 = vand.u32 %v68, 127
    %v70 = vperm.slane %v54, %v69
    %v71 = vadd.s32 %v69, 4294967288
    %v72 = vperm.slane %v57, %v71
    %vm73 = vcmask 130112
    %v74 = vsel %vm73, %v72, %v70
    %v75 = vperm.slane %v60, %v69
    %v76 = vperm.slane %v63, %v71
    %v77 = vsel %vm73, %v76, %v75
    %vm78 = vcmask 1041409
    %v79 = vsel %vm78, %v77, %v74
    %v81 = vadd.f32 %v43, %v79
    %vm82 = vcmask 123904
    %83 = vst.msk [vmem:[#allocation2] sm:$0x3] %vm82, %v81
    // Predicated region
    $region30: #{tpu_custom_call.1} parent=1 // pred_check
      %p84 = pneg %p37
    $region31: #{tpu_custom_call.1} parent=1 // pred_check_branch
      %86 = sbr.rel (%p84) target = $region33
    $region32: #{tpu_custom_call.1} parent=1 // pred_region
      %v87 = vld [vmem:[#allocation2] sm:$0x3]
      %v88 = vmul.f32 %v87, 0.00390625
      %v89 = vld [vmem:[%s1] sm:$0xff]
      %v90 = vld [vmem:[%s1 + $0x8] sm:$0xff]
      %v91 = vld [vmem:[%s2] sm:$0x1]
      %v93 = vperm.slane %v91, 0
      %vm95 = vcmask 130048
      %v97 = vsel %vm95, %v88, 0
      %99 = vmatpush.msra.mxu0 0.0
      %100 = vmatpush.msra.mxu0 0.0
      %101 = vmatpush.msra.mxu0 0.0
      %102 = vmatpush.msra.mxu0 0.0
      %103 = vmatpush.msra.mxu0 0.0
      %104 = vmatpush.msra.mxu0 0.0
      %105 = vmatpush.msra.mxu0 0.0
      %106 = vmatpush.msra.mxu0 0.0
      %107 = vmatpush.msra.mxu0 0.0
      %108 = vmatpush.msra.mxu0 0.0
      %109 = vmatpush.msra.mxu0 0.0
      %110 = vmatpush.msra.mxu0 0.0
      %111 = vmatpush.msra.mxu0 0.0
      %112 = vmatpush.msra.mxu0 0.0
      %113 = vmatpush.msra.mxu0 %v90
      %114 = vmatpush.msra.mxu0 %v89
      %115 = vmatmul.f32.gmra.mxu0 %v97
      %v116 = vpop.f32.mrf.mxu0
      %v117 = vadd.f32 %v93, %v116
      %118 = vdwg.mxu0
      %v119 = vxor.u32 %v117, 2147483648
      %v120 = vmul.f32 %v119, 1.442695
      %v121 = vpow.pop %v120
      %v122 = vadd.f32 %v121, 1.0
      %v123 = vrcp.pop %v122
      %v124 = vmul.f32 %v122, %v123
      %v125 = vsub.f32 1.0, %v124
      %v126 = vmul.f32 %v123, %v125
      %v127 = vadd.f32 %v123, %v126
      %vm128 = vweird.f32 %v122
      %vm129 = vweird.f32 %v123
      %vm130 = vmor %vm128, %vm129
      %v131 = vsel %vm130, %v123, %v127
      %v132 = vand.u32 2147483647, %v122
      %vm133 = vcmp.eq.f32.partialorder %v132, 8.507059e+37
      %v134 = vand.u32 %v122, 2147483648
      %v135 = vor.u32 1.1754944e-38, %v134
      %v136 = vsel %vm133, %v135, %v131
      %v137 = vmul.f32 1.0, %v136
      %v138 = vmul.f32 %v117, %v137
      %v139 = vld [vmem:[%s3] sm:$0xff]
      %v140 = vld [vmem:[%s4] sm:$0x1]
      %v142 = vperm.slane %v140, 0
      %vm144 = vcmask 64512
      %v146 = vsel %vm144, %v138, 0
      %148 = vmatpush.msra.mxu0 0.0
      %149 = vmatpush.msra.mxu0 0.0
      %150 = vmatpush.msra.mxu0 0.0
      %151 = vmatpush.msra.mxu0 0.0
      %152 = vmatpush.msra.mxu0 0.0
      %153 = vmatpush.msra.mxu0 0.0
      %154 = vmatpush.msra.mxu0 0.0
      %155 = vmatpush.msra.mxu0 0.0
      %156 = vmatpush.msra.mxu0 0.0
      %157 = vmatpush.msra.mxu0 0.0
      %158 = vmatpush.msra.mxu0 0.0
      %159 = vmatpush.msra.mxu0 0.0
      %160 = vmatpush.msra.mxu0 0.0
      %161 = vmatpush.msra.mxu0 0.0
      %162 = vmatpush.msra.mxu0 0.0
      %163 = vmatpush.msra.mxu0 %v139
      %164 = vmatmul.f32.gmra.mxu0 %v146
      %v165 = vpop.f32.mrf.mxu0
      %v166 = vadd.f32 %v142, %v165
      %167 = vdwg.mxu0
      %v168 = vxor.u32 %v166, 2147483648
      %v169 = vmul.f32 %v168, 1.442695
      %v170 = vpow.pop %v169
      %v171 = vadd.f32 %v170, 1.0
      %v172 = vrcp.pop %v171
      %v173 = vmul.f32 %v171, %v172
      %v174 = vsub.f32 1.0, %v173
      %v175 = vmul.f32 %v172, %v174
      %v176 = vadd.f32 %v172, %v175
      %vm177 = vweird.f32 %v171
      %vm178 = vweird.f32 %v172
      %vm179 = vmor %vm177, %vm178
      %v180 = vsel %vm179, %v172, %v176
      %v181 = vand.u32 2147483647, %v171
      %vm182 = vcmp.eq.f32.partialorder %v181, 8.507059e+37
      %v183 = vand.u32 %v171, 2147483648
      %v184 = vor.u32 1.1754944e-38, %v183
      %v185 = vsel %vm182, %v184, %v180
      %v186 = vmul.f32 1.0, %v185
      %187 = vst.msk [vmem:[#allocation6] sm:$0x3] %vm82, %v186
    $region33: #{tpu_custom_call.1} parent=1 // pred_fallthru
      _
    // Predicated region
    $region34: #{tpu_custom_call.1} parent=1 // pred_check
      _
    $region35: #{tpu_custom_call.1} parent=1 // pred_check_branch
      %189 = sbr.rel (0) target = $region37
    $region36: #{tpu_custom_call.1} parent=1 // pred_region
      %191 = vsyncadd [#allocation5], 0
      %s193 = sshll.u32 [#allocation6], 4
      %s194 = int_to_ptr.vmem [resolvable:$true] %s193
      %s195 = sshll.u32 %s5, 4
      %s196 = int_to_ptr.hbm [resolvable:$true] %s195
      %198 = dma.vmem_to_hbm [thread:$0]  %s194, 32, %s196, [#allocation5]
    $region37: #{tpu_custom_call.1} parent=1 // pred_fallthru
      _
    // Predicated region
    $region38: #{tpu_custom_call.1} parent=1 // pred_check
      _
    $region39: #{tpu_custom_call.1} parent=1 // pred_check_branch
      %200 = sbr.rel (0) target = $region41
    $region40: #{tpu_custom_call.1} parent=1 // pred_region
      %202 = dma.done [#allocation5], 32
    $region41: #{tpu_custom_call.1} parent=1 // pred_fallthru
      _
    %203 = vsyncpa [#allocation4], 1
    %204 = vsyncpa [#allocation5], 1

</llo_original>
